<compile_context>
chip_gen: v7x
topology: tpu7x:2x2x1
jax: 0.10.0
libtpu: 0.0.40
codegen_flags: <defaults>
</compile_context>

<pallas_src>
import jax
import jax.numpy as jnp
from jax.experimental import pallas as pl
from jax.experimental.pallas import tpu as pltpu

# ---------------------------- problem sizes ----------------------------------
B = 16          # batch (rows of theta / x_prev) -- processed in one block
H0 = 32         # n_hidden_layers[0]
H1 = 32         # n_hidden_layers[1]
N_STATES = 4    # n_states


# ------------------------------ Pallas kernel --------------------------------
def jacob1_kernel(theta_ref, x_prev_ref, w0_ref, b0_ref, w1_ref, b1_ref,
                  w2_ref, b2_ref, r_ref, out_ref):
    theta = theta_ref[...]                       # (B, 1) f32

    # First Linear applied to _q = [theta, cos(theta), sin(theta)].
    # K == 3 with each column known analytically, so decompose q @ W0 into
    # three rank-1 broadcast-multiply updates instead of a tiny-K matmul +
    # hstack (keeps this layer on the VPU/EUP, no MXU padding waste).
    w0 = w0_ref[...]                             # (3, H0)
    h = (theta * w0[0:1, :]
         + jnp.cos(theta) * w0[1:2, :]
         + jnp.sin(theta) * w0[2:3, :]
         + b0_ref[...])                          # (B, H0)
    h = jnp.tanh(h)

    # Hidden Linear + activation (MXU matmul, f32 accumulation).
    h = jnp.tanh(
        jnp.dot(h, w1_ref[...], preferred_element_type=jnp.float32)
        + b1_ref[...])                           # (B, H1)

    # Output Linear.
    jq = (jnp.dot(h, w2_ref[...], preferred_element_type=jnp.float32)
          + b2_ref[...])                         # (B, N_STATES)

    # out = r * jq + x_prev   (r is the learned scalar, read from SMEM)
    out_ref[...] = r_ref[0] * jq + x_prev_ref[...]


# ------------------------------ wrapper --------------------------------------
def jacob1_forward(theta, x_prev, w0, b0, w1, b1, w2, b2, r):
    batch = theta.shape[0]
    n_states = x_prev.shape[1]
    assert theta.shape == (batch, 1) and x_prev.shape == (batch, n_states)

    r1d = jnp.reshape(r, (1,)).astype(jnp.float32)   # scalar -> SMEM (1,)

    vmem = pl.BlockSpec(memory_space=pltpu.MemorySpace.VMEM)
    smem = pl.BlockSpec(memory_space=pltpu.MemorySpace.SMEM)

    # Single invocation (no grid): all arrays fit comfortably in VMEM, so one
    # block per array avoids per-grid-step overhead and megacore sharding.
    return pl.pallas_call(
        jacob1_kernel,
        out_shape=jax.ShapeDtypeStruct((batch, n_states), jnp.float32),
        in_specs=[
            vmem,   # theta      (B, 1)
            vmem,   # x_prev     (B, N_STATES)
            vmem,   # W0         (3, H0)
            vmem,   # b0         (1, H0)
            vmem,   # W1         (H0, H1)
            vmem,   # b1         (1, H1)
            vmem,   # W2         (H1, N_STATES)
            vmem,   # b2         (1, N_STATES)
            smem,   # r          (1,)
        ],
        out_specs=vmem,
    )(theta, x_prev, w0, b0, w1, b1, w2, b2, r1d)


# ------------------------------ main ------------------------------------------
if __name__ == "__main__":
    key = jax.random.PRNGKey(0)
    k_theta, k_x, k_w0, k_w1, k_w2 = jax.random.split(key, 5)

    # Inputs
    theta = jax.random.normal(k_theta, (B, 1), dtype=jnp.float32)
    x_prev = jax.random.normal(k_x, (B, N_STATES), dtype=jnp.float32)

    # Parameters (deterministic init; weights ~ scaled normal, biases = 0)
    w0 = (jax.random.normal(k_w0, (3, H0), dtype=jnp.float32)
          * (2.0 / (3 + H0)) ** 0.5)
    b0 = jnp.zeros((1, H0), dtype=jnp.float32)
    w1 = (jax.random.normal(k_w1, (H0, H1), dtype=jnp.float32)
          * (2.0 / (H0 + H1)) ** 0.5)
    b1 = jnp.zeros((1, H1), dtype=jnp.float32)
    w2 = (jax.random.normal(k_w2, (H1, N_STATES), dtype=jnp.float32)
          * (2.0 / (H1 + N_STATES)) ** 0.5)
    b2 = jnp.zeros((1, N_STATES), dtype=jnp.float32)
    r = jnp.array([0.5], dtype=jnp.float32)   # the learned scalar self.r

    out = jacob1_forward(theta, x_prev, w0, b0, w1, b1, w2, b2, r)
    out = jax.block_until_ready(out)

    # Pure-JAX reference (same math as the PyTorch module)
    q = jnp.hstack([theta, jnp.cos(theta), jnp.sin(theta)])
    h = jnp.tanh(q @ w0 + b0)
    h = jnp.tanh(h @ w1 + b1)
    jq = h @ w2 + b2
    ref = r[0] * jq + x_prev

    assert out.shape == (B, N_STATES)
    assert jnp.allclose(out, ref, atol=1e-5, rtol=1e-5), "mismatch vs reference"
    print("KERNEL_OK")
</pallas_src>

<mosaic_0001>
module attributes {stable_mosaic.version = 11 : i64} {
  func.func @jacob1_kernel(%arg0: memref<16x1xf32, #tpu.memory_space<vmem>>, %arg1: memref<16x4xf32, #tpu.memory_space<vmem>>, %arg2: memref<3x32xf32, #tpu.memory_space<vmem>>, %arg3: memref<1x32xf32, #tpu.memory_space<vmem>>, %arg4: memref<32x32xf32, #tpu.memory_space<vmem>>, %arg5: memref<1x32xf32, #tpu.memory_space<vmem>>, %arg6: memref<32x4xf32, #tpu.memory_space<vmem>>, %arg7: memref<1x4xf32, #tpu.memory_space<vmem>>, %arg8: memref<1xf32, #tpu.memory_space<smem>>, %arg9: memref<16x4xf32, #tpu.memory_space<vmem>>) attributes {dimension_semantics = [], scalar_prefetch = 0 : i64, scratch_operands = 0 : i64, tpu.core_type = #tpu.core_type<tc>} {
    %c0 = arith.constant 0 : index
    %c0_0 = arith.constant 0 : index
    %0 = vector.load %arg0[%c0, %c0_0] : memref<16x1xf32, #tpu.memory_space<vmem>>, vector<16x1xf32>
    %c0_1 = arith.constant 0 : index
    %c0_2 = arith.constant 0 : index
    %1 = vector.load %arg2[%c0_1, %c0_2] : memref<3x32xf32, #tpu.memory_space<vmem>>, vector<3x32xf32>
    %2 = vector.extract_strided_slice %1 {offsets = [0, 0], sizes = [1, 32], strides = [1, 1]} : vector<3x32xf32> to vector<1x32xf32>
    %3 = vector.broadcast %0 : vector<16x1xf32> to vector<16x32xf32>
    %4 = vector.broadcast %2 : vector<1x32xf32> to vector<16x32xf32>
    %5 = arith.mulf %3, %4 : vector<16x32xf32>
    %6 = math.cos %0 : vector<16x1xf32>
    %7 = vector.extract_strided_slice %1 {offsets = [1, 0], sizes = [1, 32], strides = [1, 1]} : vector<3x32xf32> to vector<1x32xf32>
    %8 = vector.broadcast %6 : vector<16x1xf32> to vector<16x32xf32>
    %9 = vector.broadcast %7 : vector<1x32xf32> to vector<16x32xf32>
    %10 = arith.mulf %8, %9 : vector<16x32xf32>
    %11 = arith.addf %5, %10 : vector<16x32xf32>
    %12 = math.sin %0 : vector<16x1xf32>
    %13 = vector.extract_strided_slice %1 {offsets = [2, 0], sizes = [1, 32], strides = [1, 1]} : vector<3x32xf32> to vector<1x32xf32>
    %14 = vector.broadcast %12 : vector<16x1xf32> to vector<16x32xf32>
    %15 = vector.broadcast %13 : vector<1x32xf32> to vector<16x32xf32>
    %16 = arith.mulf %14, %15 : vector<16x32xf32>
    %17 = arith.addf %11, %16 : vector<16x32xf32>
    %c0_3 = arith.constant 0 : index
    %c0_4 = arith.constant 0 : index
    %18 = vector.load %arg3[%c0_3, %c0_4] : memref<1x32xf32, #tpu.memory_space<vmem>>, vector<1x32xf32>
    %19 = vector.broadcast %18 : vector<1x32xf32> to vector<16x32xf32>
    %20 = arith.addf %17, %19 : vector<16x32xf32>
    %21 = math.tanh %20 : vector<16x32xf32>
    %c0_5 = arith.constant 0 : index
    %c0_6 = arith.constant 0 : index
    %22 = vector.load %arg4[%c0_5, %c0_6] : memref<32x32xf32, #tpu.memory_space<vmem>>, vector<32x32xf32>
    %cst = arith.constant dense<0.000000e+00> : vector<16x32xf32>
    %23 = tpu.matmul %21, %22, %cst {dimension_numbers = #tpu.dot_dimension_numbers<[1], [0], [0], [1], [0, 0, 1, 1], [], []>} : vector<16x32xf32>, vector<32x32xf32>, vector<16x32xf32> -> vector<16x32xf32>
    %c0_7 = arith.constant 0 : index
    %c0_8 = arith.constant 0 : index
    %24 = vector.load %arg5[%c0_7, %c0_8] : memref<1x32xf32, #tpu.memory_space<vmem>>, vector<1x32xf32>
    %25 = vector.broadcast %24 : vector<1x32xf32> to vector<16x32xf32>
    %26 = arith.addf %23, %25 : vector<16x32xf32>
    %27 = math.tanh %26 : vector<16x32xf32>
    %c0_9 = arith.constant 0 : index
    %c0_10 = arith.constant 0 : index
    %28 = vector.load %arg6[%c0_9, %c0_10] : memref<32x4xf32, #tpu.memory_space<vmem>>, vector<32x4xf32>
    %cst_11 = arith.constant dense<0.000000e+00> : vector<16x4xf32>
    %29 = tpu.matmul %27, %28, %cst_11 {dimension_numbers = #tpu.dot_dimension_numbers<[1], [0], [0], [1], [0, 0, 1, 1], [], []>} : vector<16x32xf32>, vector<32x4xf32>, vector<16x4xf32> -> vector<16x4xf32>
    %c0_12 = arith.constant 0 : index
    %c0_13 = arith.constant 0 : index
    %30 = vector.load %arg7[%c0_12, %c0_13] : memref<1x4xf32, #tpu.memory_space<vmem>>, vector<1x4xf32>
    %31 = vector.broadcast %30 : vector<1x4xf32> to vector<16x4xf32>
    %32 = arith.addf %29, %31 : vector<16x4xf32>
    %c0_14 = arith.constant 0 : index
    %33 = memref.load %arg8[%c0_14] : memref<1xf32, #tpu.memory_space<smem>>
    %34 = vector.broadcast %33 : f32 to vector<16x4xf32>
    %35 = arith.mulf %34, %32 : vector<16x4xf32>
    %c0_15 = arith.constant 0 : index
    %c0_16 = arith.constant 0 : index
    %36 = vector.load %arg1[%c0_15, %c0_16] : memref<16x4xf32, #tpu.memory_space<vmem>>, vector<16x4xf32>
    %37 = arith.addf %35, %36 : vector<16x4xf32>
    %c0_17 = arith.constant 0 : index
    %c0_18 = arith.constant 0 : index
    %38 = vector.load %arg9[%c0_17, %c0_18] : memref<16x4xf32, #tpu.memory_space<vmem>>, vector<16x4xf32>
    tpu.vector_store %arg9[%c0_17, %c0_18], %37 {strides = array<i32>} : memref<16x4xf32, #tpu.memory_space<vmem>>, vector<16x4xf32>,
    return
  }
}

</mosaic_0001>

<llo_original>
// kernel: tpu_custom_call.1
$region0: #{tpu_custom_call.1}
  #allocation0 [shape = 'u32[]', space=smem, size = 0x4, offset = 0x4, fixed_abs, tag = 'smem constant byte address 0x4 - core index']
  #allocation1 [shape = 'u32[144,128]{1,0:T(1,128)}', space=vmem, size = 0x12000, scoped, tag = 'internal scratch']
  #allocation2 [shape = 'f32[1]{0:T(128)S(6)}', space=smem, size = 0x200, scoped, tag = 'scoped memory for tpu_custom_call.1']
  %s0 = inlined_call_operand.vmem [shape: f32[16,1], index: 0, kind: input, shape index: {}]
  %s1 = inlined_call_operand.vmem [shape: f32[16,4], index: 1, kind: input, shape index: {}]
  %s2 = inlined_call_operand.vmem [shape: f32[3,32], index: 2, kind: input, shape index: {}]
  %s3 = inlined_call_operand.vmem [shape: f32[1,32], index: 3, kind: input, shape index: {}]
  %s4 = inlined_call_operand.vmem [shape: f32[32,32], index: 4, kind: input, shape index: {}]
  %s5 = inlined_call_operand.vmem [shape: f32[1,32], index: 5, kind: input, shape index: {}]
  %s6 = inlined_call_operand.vmem [shape: f32[32,4], index: 6, kind: input, shape index: {}]
  %s7 = inlined_call_operand.vmem [shape: f32[1,4], index: 7, kind: input, shape index: {}]
  %s8 = inlined_call_operand.<no memory space> [shape: f32[1], index: 8, kind: input, shape index: {}]
  %s9 = inlined_call_operand.vmem [shape: f32[16,4], index: 9, kind: output, shape index: {}]
  %s10 = sld [smem:[#allocation0]]
  $region46: #{tpu_custom_call.1} parent=0
    _
  %s12 = ssub.s32 1, %s10
  %s13 = scalar_select 0, %s12, %s10
  %14 = sst [smem:[#allocation2]] %s8
  // Predicated region
  $region2: #{tpu_custom_call.1} parent=0 // pred_check
    _
  $region3: #{tpu_custom_call.1} parent=0 // pred_check_branch
    %16 = sbr.rel (0) target = $region5
  $region4: #{tpu_custom_call.1} parent=0 // pred_region
    _
  $region5: #{tpu_custom_call.1} parent=0 // pred_fallthru
    _
  // Predicated region
  $region6: #{tpu_custom_call.1} parent=0 // pred_check
    _
  $region7: #{tpu_custom_call.1} parent=0 // pred_check_branch
    %18 = sbr.rel (0) target = $region9
  $region8: #{tpu_custom_call.1} parent=0 // pred_region
    _
  $region9: #{tpu_custom_call.1} parent=0 // pred_fallthru
    _
  // Predicated region
  $region10: #{tpu_custom_call.1} parent=0 // pred_check
    _
  $region11: #{tpu_custom_call.1} parent=0 // pred_check_branch
    %20 = sbr.rel (0) target = $region13
  $region12: #{tpu_custom_call.1} parent=0 // pred_region
    _
  $region13: #{tpu_custom_call.1} parent=0 // pred_fallthru
    _
  // Predicated region
  $region14: #{tpu_custom_call.1} parent=0 // pred_check
    _
  $region15: #{tpu_custom_call.1} parent=0 // pred_check_branch
    %22 = sbr.rel (0) target = $region17
  $region16: #{tpu_custom_call.1} parent=0 // pred_region
    _
  $region17: #{tpu_custom_call.1} parent=0 // pred_fallthru
    _
  // Predicated region
  $region18: #{tpu_custom_call.1} parent=0 // pred_check
    _
  $region19: #{tpu_custom_call.1} parent=0 // pred_check_branch
    %24 = sbr.rel (0) target = $region21
  $region20: #{tpu_custom_call.1} parent=0 // pred_region
    _
  $region21: #{tpu_custom_call.1} parent=0 // pred_fallthru
    _
  // Predicated region
  $region22: #{tpu_custom_call.1} parent=0 // pred_check
    _
  $region23: #{tpu_custom_call.1} parent=0 // pred_check_branch
    %26 = sbr.rel (0) target = $region25
  $region24: #{tpu_custom_call.1} parent=0 // pred_region
    _
  $region25: #{tpu_custom_call.1} parent=0 // pred_fallthru
    _
  // Predicated region
  $region26: #{tpu_custom_call.1} parent=0 // pred_check
    _
  $region27: #{tpu_custom_call.1} parent=0 // pred_check_branch
    %28 = sbr.rel (0) target = $region29
  $region28: #{tpu_custom_call.1} parent=0 // pred_region
    _
  $region29: #{tpu_custom_call.1} parent=0 // pred_fallthru
    _
  // Predicated region
  $region30: #{tpu_custom_call.1} parent=0 // pred_check
    _
  $region31: #{tpu_custom_call.1} parent=0 // pred_check_branch
    %30 = sbr.rel (0) target = $region33
  $region32: #{tpu_custom_call.1} parent=0 // pred_region
    _
  $region33: #{tpu_custom_call.1} parent=0 // pred_fallthru
    _
  // Predicated region
  $region34: #{tpu_custom_call.1} parent=0 // pred_check
    _
  $region35: #{tpu_custom_call.1} parent=0 // pred_check_branch
    %32 = sbr.rel (0) target = $region37
  $region36: #{tpu_custom_call.1} parent=0 // pred_region
    _
  $region37: #{tpu_custom_call.1} parent=0 // pred_fallthru
    _
  %v33 = vld [vmem:[%s0] sm:$0xff]
  %v34 = vld [vmem:[%s0 + $0x8] sm:$0xff]
  %v35 = vld [vmem:[%s2] sm:$0x7]
  %37 = vset.pattern.permute.xlu0 0
  %38 = vperm.xlu0 %37, %v33
  %v39 = vpop.permute.xlu0 %38
  %42 = vset.pattern.permute.xlu0 0
  %43 = vperm.xlu0 %42, %v34
  %v44 = vpop.permute.xlu0 %43
  %v46 = vlaneseq
  %v47 = vshrl.u32 %v46, 7
  %v48 = vsub.s32 0, %v47
  %v49 = vrot.slane %v35, %v48
  %v50 = vmul.f32 %v39, %v49
  %v51 = vmul.f32 %v44, %v49
  %v52 = vand.u32 2147483647, %v33
  %vm53 = vcmp.le.f32.partialorder %v52, 0.7853982
  %vm54 = vcmp.lt.s32.totalorder %v33, 0
  %v55 = vand.u32 %v33, 2139095040
  %v56 = vshrl.u32 %v55, 23
  %v57 = vsub.s32 %v56, 127
  %v58 = vand.u32 2147483647, %v33
  %v59 = vand.u32 %v58, 8388607
  %v60 = vor.u32 %v59, 8388608
  %v61 = vsub.s32 0, %v60
  %v62 = vadd.s32 %v57, 1
  %vm63 = vcmp.gt.s32.totalorder %v62, 0
  %v64 = vsel %vm63, %v62, 0
  %v65 = vshrl.u32 %v64, 5
  %v66 = vand.u32 %v64, 31
  %v67 = vsub.s32 32, %v66
  %v68 = vshrl.u32 683565275, %v67
  %v69 = vshll.u32 683565275, %v66
  %v70 = vshrl.u32 2475754826, %v67
  %v71 = vor.u32 %v69, %v70
  %v72 = vshll.u32 2475754826, %v66
  %v73 = vshrl.u32 2131351028, %v67
  %v74 = vor.u32 %v72, %v73
  %v75 = vshll.u32 2131351028, %v66
  %v76 = vshrl.u32 2102212464, %v67
  %v77 = vor.u32 %v75, %v76
  %v78 = vshll.u32 2102212464, %v66
  %v79 = vshrl.u32 920167782, %v67
  %v80 = vor.u32 %v78, %v79
  %v81 = vshll.u32 920167782, %v66
  %v82 = vshrl.u32 1326507024, %v67
  %v83 = vor.u32 %v81, %v82
  %vm84 = vcmp.lt.s32.totalorder %v65, 1
  %vm85 = vcmp.lt.s32.totalorder %v65, 2
  %vm86 = vcmp.lt.s32.totalorder %v65, 3
  %vm87 = vcmp.lt.s32.totalorder %v65, 4
  %v88 = vsel %vm84, %v68, %v71
  %v89 = vsel %vm87, %v77, 2102212464
  %v90 = vsel %vm86, %v74, %v89
  %v91 = vsel %vm85, %v88, %v90
  %v92 = vsel %vm84, %v71, %v74
  %v93 = vsel %vm87, %v80, 920167782
  %v94 = vsel %vm86, %v77, %v93
  %v95 = vsel %vm85, %v92, %v94
  %v96 = vsel %vm84, %v74, %v77
  %v97 = vsel %vm87, %v83, 1326507024
  %v98 = vsel %vm86, %v80, %v97
  %v99 = vsel %vm85, %v96, %v98
  %v100 = vshll.u32 %v60, 8
  %v101 = vmul.u32.u64.compose %v100, %v99
  %v102 = vextract.low.u32 %v101
  %v103 = vextract.high.u32 %v101
  %v104 = vmul.u32.u64.compose %v100, %v95
  %v105 = vextract.low.u32 %v104
  %v106 = vextract.high.u32 %v104
  %v107 = vmul.u32 %v100, %v91
  %v108 = vadd.s32 %v103, %v105
  %vm109 = vc.u32 %v103, %v105
  %v110 = vadd.s32 %v106, 1
  %v111 = vsel %vm109, %v110, %v106
  %v112 = vadd.s32 %v107, %v111
  %v113 = vadd.s32 %v112, 536870912
  %v114 = vshrl.u32 %v113, 30
  %v115 = vshll.u32 %v114, 30
  %v116 = vsub.s32 %v112, %v115
  %vm117 = vcmp.lt.s32.totalorder %v116, 0
  %v118 = vsub.s32 0, %v116
  %v119 = vsel %vm117, %v118, %v116
  %v120 = vclz %v119
  %v121 = vsub.s32 %v120, 2
  %vm122 = vcmp.gt.s32.totalorder 0, %v121
  %v123 = vsel %vm122, 0, %v121
  %v124 = vsub.s32 32, %v123
  %v125 = vshll.u32 %v116, %v123
  %v126 = vshrl.u32 %v108, %v124
  %v127 = vor.u32 %v125, %v126
  %v128 = vsub.s32 4294967266, %v123
  %v129 = vadd.s32 %v128, 127
  %v130 = vshll.u32 %v129, 23
  %v131 = vor.u32 4788187, %v130
  %v132 = vand.u32 2147483647, %v131
  %v134 = vcvt.s32.f32 %v127
  %v135 = vmul.f32 %v134, %v132
  %v136 = vxor.u32 %v135, 2147483648
  %v137 = vsel %vm54, %v136, %v135
  %v138 = vsub.s32 4, %v114
  %v139 = vsel %vm54, %v138, %v114
  %v140 = vsel %vm53, %v33, %v137
  %v141 = vsel %vm53, 0, %v139
  %v142 = vcosq.f32.pop %v140
  %v143 = vsinq.f32.pop %v140
  %vm144 = vweird.f32 %v33
  %v145 = vand.u32 %v141, 3
  %vm146 = vcmp.lt.s32.totalorder %v145, 2
  %vm147 = vcmp.eq.s32.totalorder %v145, 0
  %v148 = vxor.u32 %v143, 2147483648
  %v149 = vsel %vm147, %v142, %v148
  %vm150 = vcmp.eq.s32.totalorder %v145, 2
  %v151 = vxor.u32 %v142, 2147483648
  %v152 = vsel %vm150, %v151, %v143
  %v153 = vsel %vm146, %v149, %v152
  %v154 = vsel %vm144, nan, %v153
  %v155 = vand.u32 2147483647, %v34
  %vm156 = vcmp.le.f32.partialorder %v155, 0.7853982
  %vm157 = vcmp.lt.s32.totalorder %v34, 0
  %v158 = vand.u32 %v34, 2139095040
  %v159 = vshrl.u32 %v158, 23
  %v160 = vsub.s32 %v159, 127
  %v161 = vand.u32 2147483647, %v34
  %v162 = vand.u32 %v161, 8388607
  %v163 = vor.u32 %v162, 8388608
  %v164 = vsub.s32 0, %v163
  %v165 = vadd.s32 %v160, 1
  %vm166 = vcmp.gt.s32.totalorder %v165, 0
  %v167 = vsel %vm166, %v165, 0
  %v168 = vshrl.u32 %v167, 5
  %v169 = vand.u32 %v167, 31
  %v170 = vsub.s32 32, %v169
  %v171 = vshrl.u32 683565275, %v170
  %v172 = vshll.u32 683565275, %v169
  %v173 = vshrl.u32 2475754826, %v170
  %v174 = vor.u32 %v172, %v173
  %v175 = vshll.u32 2475754826, %v169
  %v176 = vshrl.u32 2131351028, %v170
  %v177 = vor.u32 %v175, %v176
  %v178 = vshll.u32 2131351028, %v169
  %v179 = vshrl.u32 2102212464, %v170
  %v180 = vor.u32 %v178, %v179
  %v181 = vshll.u32 2102212464, %v169
  %v182 = vshrl.u32 920167782, %v170
  %v183 = vor.u32 %v181, %v182
  %v184 = vshll.u32 920167782, %v169
  %v185 = vshrl.u32 1326507024, %v170
  %v186 = vor.u32 %v184, %v185
  %vm187 = vcmp.lt.s32.totalorder %v168, 1
  %vm188 = vcmp.lt.s32.totalorder %v168, 2
  %vm189 = vcmp.lt.s32.totalorder %v168, 3
  %vm190 = vcmp.lt.s32.totalorder %v168, 4
  %v191 = vsel %vm187, %v171, %v174
  %v192 = vsel %vm190, %v180, 2102212464
  %v193 = vsel %vm189, %v177, %v192
  %v194 = vsel %vm188, %v191, %v193
  %v195 = vsel %vm187, %v174, %v177
  %v196 = vsel %vm190, %v183, 920167782
  %v197 = vsel %vm189, %v180, %v196
  %v198 = vsel %vm188, %v195, %v197
  %v199 = vsel %vm187, %v177, %v180
  %v200 = vsel %vm190, %v186, 1326507024
  %v201 = vsel %vm189, %v183, %v200
  %v202 = vsel %vm188, %v199, %v201
  %v203 = vshll.u32 %v163, 8
  %v204 = vmul.u32.u64.compose %v203, %v202
  %v205 = vextract.low.u32 %v204
  %v206 = vextract.high.u32 %v204
  %v207 = vmul.u32.u64.compose %v203, %v198
  %v208 = vextract.low.u32 %v207
  %v209 = vextract.high.u32 %v207
  %v210 = vmul.u32 %v203, %v194
  %v211 = vadd.s32 %v206, %v208
  %vm212 = vc.u32 %v206, %v208
  %v213 = vadd.s32 %v209, 1
  %v214 = vsel %vm212, %v213, %v209
  %v215 = vadd.s32 %v210, %v214
  %v216 = vadd.s32 %v215, 536870912
  %v217 = vshrl.u32 %v216, 30
  %v218 = vshll.u32 %v217, 30
  %v219 = vsub.s32 %v215, %v218
  %vm220 = vcmp.lt.s32.totalorder %v219, 0
  %v221 = vsub.s32 0, %v219
  %v222 = vsel %vm220, %v221, %v219
  %v223 = vclz %v222
  %v224 = vsub.s32 %v223, 2
  %vm225 = vcmp.gt.s32.totalorder 0, %v224
  %v226 = vsel %vm225, 0, %v224
  %v227 = vsub.s32 32, %v226
  %v228 = vshll.u32 %v219, %v226
  %v229 = vshrl.u32 %v211, %v227
  %v230 = vor.u32 %v228, %v229
  %v231 = vsub.s32 4294967266, %v226
  %v232 = vadd.s32 %v231, 127
  %v233 = vshll.u32 %v232, 23
  %v234 = vor.u32 4788187, %v233
  %v235 = vand.u32 2147483647, %v234
  %v237 = vcvt.s32.f32 %v230
  %v238 = vmul.f32 %v237, %v235
  %v239 = vxor.u32 %v238, 2147483648
  %v240 = vsel %vm157, %v239, %v238
  %v241 = vsub.s32 4, %v217
  %v242 = vsel %vm157, %v241, %v217
  %v243 = vsel %vm156, %v34, %v240
  %v244 = vsel %vm156, 0, %v242
  %v245 = vcosq.f32.pop %v243
  %v246 = vsinq.f32.pop %v243
  %vm247 = vweird.f32 %v34
  %v248 = vand.u32 %v244, 3
  %vm249 = vcmp.lt.s32.totalorder %v248, 2
  %vm250 = vcmp.eq.s32.totalorder %v248, 0
  %v251 = vxor.u32 %v246, 2147483648
  %v252 = vsel %vm250, %v245, %v251
  %vm253 = vcmp.eq.s32.totalorder %v248, 2
  %v254 = vxor.u32 %v245, 2147483648
  %v255 = vsel %vm253, %v254, %v246
  %v256 = vsel %vm249, %v252, %v255
  %v257 = vsel %vm247, nan, %v256
  %259 = vset.pattern.permute.xlu0 0
  %260 = vperm.xlu0 %259, %v154
  %v261 = vpop.permute.xlu0 %260
  %264 = vset.pattern.permute.xlu0 0
  %265 = vperm.xlu0 %264, %v257
  %v266 = vpop.permute.xlu0 %265
  %v268 = vlaneseq
  %v269 = vshrl.u32 %v268, 7
  %v270 = vsub.s32 1, %v269
  %v271 = vrot.slane %v35, %v270
  %v272 = vmul.f32 %v261, %v271
  %v273 = vmul.f32 %v266, %v271
  %v274 = vadd.f32 %v50, %v272
  %v275 = vadd.f32 %v51, %v273
  %v276 = vand.u32 2147483647, %v33
  %vm277 = vcmp.le.f32.partialorder %v276, 0.7853982
  %vm278 = vcmp.lt.s32.totalorder %v33, 0
  %v279 = vand.u32 %v33, 2139095040
  %v280 = vshrl.u32 %v279, 23
  %v281 = vsub.s32 %v280, 127
  %v282 = vand.u32 2147483647, %v33
  %v283 = vand.u32 %v282, 8388607
  %v284 = vor.u32 %v283, 8388608
  %v285 = vsub.s32 0, %v284
  %v286 = vadd.s32 %v281, 1
  %vm287 = vcmp.gt.s32.totalorder %v286, 0
  %v288 = vsel %vm287, %v286, 0
  %v289 = vshrl.u32 %v288, 5
  %v290 = vand.u32 %v288, 31
  %v291 = vsub.s32 32, %v290
  %v292 = vshrl.u32 683565275, %v291
  %v293 = vshll.u32 683565275, %v290
  %v294 = vshrl.u32 2475754826, %v291
  %v295 = vor.u32 %v293, %v294
  %v296 = vshll.u32 2475754826, %v290
  %v297 = vshrl.u32 2131351028, %v291
  %v298 = vor.u32 %v296, %v297
  %v299 = vshll.u32 2131351028, %v290
  %v300 = vshrl.u32 2102212464, %v291
  %v301 = vor.u32 %v299, %v300
  %v302 = vshll.u32 2102212464, %v290
  %v303 = vshrl.u32 920167782, %v291
  %v304 = vor.u32 %v302, %v303
  %v305 = vshll.u32 920167782, %v290
  %v306 = vshrl.u32 1326507024, %v291
  %v307 = vor.u32 %v305, %v306
  %vm308 = vcmp.lt.s32.totalorder %v289, 1
  %vm309 = vcmp.lt.s32.totalorder %v289, 2
  %vm310 = vcmp.lt.s32.totalorder %v289, 3
  %vm311 = vcmp.lt.s32.totalorder %v289, 4
  %v312 = vsel %vm308, %v292, %v295
  %v313 = vsel %vm311, %v301, 2102212464
  %v314 = vsel %vm310, %v298, %v313
  %v315 = vsel %vm309, %v312, %v314
  %v316 = vsel %vm308, %v295, %v298
  %v317 = vsel %vm311, %v304, 920167782
  %v318 = vsel %vm310, %v301, %v317
  %v319 = vsel %vm309, %v316, %v318
  %v320 = vsel %vm308, %v298, %v301
  %v321 = vsel %vm311, %v307, 1326507024
  %v322 = vsel %vm310, %v304, %v321
  %v323 = vsel %vm309, %v320, %v322
  %v324 = vshll.u32 %v284, 8
  %v325 = vmul.u32.u64.compose %v324, %v323
  %v326 = vextract.low.u32 %v325
  %v327 = vextract.high.u32 %v325
  %v328 = vmul.u32.u64.compose %v324, %v319
  %v329 = vextract.low.u32 %v328
  %v330 = vextract.high.u32 %v328
  %v331 = vmul.u32 %v324, %v315
  %v332 = vadd.s32 %v327, %v329
  %vm333 = vc.u32 %v327, %v329
  %v334 = vadd.s32 %v330, 1
  %v335 = vsel %vm333, %v334, %v330
  %v336 = vadd.s32 %v331, %v335
  %v337 = vadd.s32 %v336, 536870912
  %v338 = vshrl.u32 %v337, 30
  %v339 = vshll.u32 %v338, 30
  %v340 = vsub.s32 %v336, %v339
  %vm341 = vcmp.lt.s32.totalorder %v340, 0
  %v342 = vsub.s32 0, %v340
  %v343 = vsel %vm341, %v342, %v340
  %v344 = vclz %v343
  %v345 = vsub.s32 %v344, 2
  %vm346 = vcmp.gt.s32.totalorder 0, %v345
  %v347 = vsel %vm346, 0, %v345
  %v348 = vsub.s32 32, %v347
  %v349 = vshll.u32 %v340, %v347
  %v350 = vshrl.u32 %v332, %v348
  %v351 = vor.u32 %v349, %v350
  %v352 = vsub.s32 4294967266, %v347
  %v353 = vadd.s32 %v352, 127
  %v354 = vshll.u32 %v353, 23
  %v355 = vor.u32 4788187, %v354
  %v356 = vand.u32 2147483647, %v355
  %v358 = vcvt.s32.f32 %v351
  %v359 = vmul.f32 %v358, %v356
  %v360 = vxor.u32 %v359, 2147483648
  %v361 = vsel %vm278, %v360, %v359
  %v362 = vsub.s32 4, %v338
  %v363 = vsel %vm278, %v362, %v338
  %v364 = vsel %vm277, %v33, %v361
  %v365 = vsel %vm277, 0, %v363
  %v366 = vcosq.f32.pop %v364
  %v367 = vsinq.f32.pop %v364
  %vm368 = vweird.f32 %v33
  %v369 = vadd.s32 %v365, 3
  %v370 = vand.u32 %v369, 3
  %vm371 = vcmp.lt.s32.totalorder %v370, 2
  %vm372 = vcmp.eq.s32.totalorder %v370, 0
  %v373 = vxor.u32 %v367, 2147483648
  %v374 = vsel %vm372, %v366, %v373
  %vm375 = vcmp.eq.s32.totalorder %v370, 2
  %v376 = vxor.u32 %v366, 2147483648
  %v377 = vsel %vm375, %v376, %v367
  %v378 = vsel %vm371, %v374, %v377
  %v379 = vsel %vm368, nan, %v378
  %v380 = vand.u32 2147483647, %v34
  %vm381 = vcmp.le.f32.partialorder %v380, 0.7853982
  %vm382 = vcmp.lt.s32.totalorder %v34, 0
  %v383 = vand.u32 %v34, 2139095040
  %v384 = vshrl.u32 %v383, 23
  %v385 = vsub.s32 %v384, 127
  %v386 = vand.u32 2147483647, %v34
  %v387 = vand.u32 %v386, 8388607
  %v388 = vor.u32 %v387, 8388608
  %v389 = vsub.s32 0, %v388
  %v390 = vadd.s32 %v385, 1
  %vm391 = vcmp.gt.s32.totalorder %v390, 0
  %v392 = vsel %vm391, %v390, 0
  %v393 = vshrl.u32 %v392, 5
  %v394 = vand.u32 %v392, 31
  %v395 = vsub.s32 32, %v394
  %v396 = vshrl.u32 683565275, %v395
  %v397 = vshll.u32 683565275, %v394
  %v398 = vshrl.u32 2475754826, %v395
  %v399 = vor.u32 %v397, %v398
  %v400 = vshll.u32 2475754826, %v394
  %v401 = vshrl.u32 2131351028, %v395
  %v402 = vor.u32 %v400, %v401
  %v403 = vshll.u32 2131351028, %v394
  %v404 = vshrl.u32 2102212464, %v395
  %v405 = vor.u32 %v403, %v404
  %v406 = vshll.u32 2102212464, %v394
  %v407 = vshrl.u32 920167782, %v395
  %v408 = vor.u32 %v406, %v407
  %v409 = vshll.u32 920167782, %v394
  %v410 = vshrl.u32 1326507024, %v395
  %v411 = vor.u32 %v409, %v410
  %vm412 = vcmp.lt.s32.totalorder %v393, 1
  %vm413 = vcmp.lt.s32.totalorder %v393, 2
  %vm414 = vcmp.lt.s32.totalorder %v393, 3
  %vm415 = vcmp.lt.s32.totalorder %v393, 4
  %v416 = vsel %vm412, %v396, %v399
  %v417 = vsel %vm415, %v405, 2102212464
  %v418 = vsel %vm414, %v402, %v417
  %v419 = vsel %vm413, %v416, %v418
  %v420 = vsel %vm412, %v399, %v402
  %v421 = vsel %vm415, %v408, 920167782
  %v422 = vsel %vm414, %v405, %v421
  %v423 = vsel %vm413, %v420, %v422
  %v424 = vsel %vm412, %v402, %v405
  %v425 = vsel %vm415, %v411, 1326507024
  %v426 = vsel %vm414, %v408, %v425
  %v427 = vsel %vm413, %v424, %v426
  %v428 = vshll.u32 %v388, 8
  %v429 = vmul.u32.u64.compose %v428, %v427
  %v430 = vextract.low.u32 %v429
  %v431 = vextract.high.u32 %v429
  %v432 = vmul.u32.u64.compose %v428, %v423
  %v433 = vextract.low.u32 %v432
  %v434 = vextract.high.u32 %v432
  %v435 = vmul.u32 %v428, %v419
  %v436 = vadd.s32 %v431, %v433
  %vm437 = vc.u32 %v431, %v433
  %v438 = vadd.s32 %v434, 1
  %v439 = vsel %vm437, %v438, %v434
  %v440 = vadd.s32 %v435, %v439
  %v441 = vadd.s32 %v440, 536870912
  %v442 = vshrl.u32 %v441, 30
  %v443 = vshll.u32 %v442, 30
  %v444 = vsub.s32 %v440, %v443
  %vm445 = vcmp.lt.s32.totalorder %v444, 0
  %v446 = vsub.s32 0, %v444
  %v447 = vsel %vm445, %v446, %v444
  %v448 = vclz %v447
  %v449 = vsub.s32 %v448, 2
  %vm450 = vcmp.gt.s32.totalorder 0, %v449
  %v451 = vsel %vm450, 0, %v449
  %v452 = vsub.s32 32, %v451
  %v453 = vshll.u32 %v444, %v451
  %v454 = vshrl.u32 %v436, %v452
  %v455 = vor.u32 %v453, %v454
  %v456 = vsub.s32 4294967266, %v451
  %v457 = vadd.s32 %v456, 127
  %v458 = vshll.u32 %v457, 23
  %v459 = vor.u32 4788187, %v458
  %v460 = vand.u32 2147483647, %v459
  %v462 = vcvt.s32.f32 %v455
  %v463 = vmul.f32 %v462, %v460
  %v464 = vxor.u32 %v463, 2147483648
  %v465 = vsel %vm382, %v464, %v463
  %v466 = vsub.s32 4, %v442
  %v467 = vsel %vm382, %v466, %v442
  %v468 = vsel %vm381, %v34, %v465
  %v469 = vsel %vm381, 0, %v467
  %v470 = vcosq.f32.pop %v468
  %v471 = vsinq.f32.pop %v468
  %vm472 = vweird.f32 %v34
  %v473 = vadd.s32 %v469, 3
  %v474 = vand.u32 %v473, 3
  %vm475 = vcmp.lt.s32.totalorder %v474, 2
  %vm476 = vcmp.eq.s32.totalorder %v474, 0
  %v477 = vxor.u32 %v471, 2147483648
  %v478 = vsel %vm476, %v470, %v477
  %vm479 = vcmp.eq.s32.totalorder %v474, 2
  %v480 = vxor.u32 %v470, 2147483648
  %v481 = vsel %vm479, %v480, %v471
  %v482 = vsel %vm475, %v478, %v481
  %v483 = vsel %vm472, nan, %v482
  %485 = vset.pattern.permute.xlu0 0
  %486 = vperm.xlu0 %485, %v379
  %v487 = vpop.permute.xlu0 %486
  %490 = vset.pattern.permute.xlu0 0
  %491 = vperm.xlu0 %490, %v483
  %v492 = vpop.permute.xlu0 %491
  %v494 = vlaneseq
  %v495 = vshrl.u32 %v494, 7
  %v496 = vsub.s32 2, %v495
  %v497 = vrot.slane %v35, %v496
  %v498 = vmul.f32 %v487, %v497
  %v499 = vmul.f32 %v492, %v497
  %v500 = vadd.f32 %v274, %v498
  %v501 = vadd.f32 %v275, %v499
  %v502 = vld [vmem:[%s3] sm:$0x1]
  %v504 = vlaneseq
  %v505 = vshrl.u32 %v504, 7
  %v506 = vsub.s32 0, %v505
  %v507 = vrot.slane %v502, %v506
  %v509 = vadd.f32 %v500, %v507
  %v510 = vadd.f32 %v501, %v507
  %v511 = vtanh.pop %v509
  %v512 = vtanh.pop %v510
  %v513 = vld [vmem:[%s4] sm:$0xff]
  %v514 = vld [vmem:[%s4 + $0x8] sm:$0xff]
  %v515 = vld [vmem:[%s4 + $0x10] sm:$0xff]
  %v516 = vld [vmem:[%s4 + $0x18] sm:$0xff]
  %v517 = vld [vmem:[%s5] sm:$0x1]
  %v519 = vlaneseq
  %v520 = vshrl.u32 %v519, 7
  %v521 = vsub.s32 0, %v520
  %v522 = vrot.slane %v517, %v521
  %vm524 = vcmask 261120
  %v526 = vsel %vm524, %v511, 0
  %v529 = vsel %vm524, %v512, 0
  %531 = vmatprep.subr.mxu0 0.0
  %532 = vmatpush1.msra.mxu0 %v513
  %533 = vmatprep.subr.mxu0 0.0
  %534 = vmatpush1.msra.mxu0 %v514
  %535 = vmatprep.subr.mxu0 0.0
  %536 = vmatpush1.msra.mxu0 %v515
  %537 = vmatprep.subr.mxu0 0.0
  %538 = vmatpush1.msra.mxu0 %v516
  %539 = vmatprep.subr.mxu0 0.0
  %540 = vmatpush1.msra.mxu0 0.0
  %541 = vmatprep.subr.mxu0 0.0
  %542 = vmatpush1.msra.mxu0 0.0
  %543 = vmatprep.subr.mxu0 0.0
  %544 = vmatpush1.msra.mxu0 0.0
  %545 = vmatprep.subr.mxu0 0.0
  %546 = vmatpush1.msra.mxu0 0.0
  %547 = vmatprep.subr.mxu0 0.0
  %548 = vmatpush1.msra.mxu0 0.0
  %549 = vmatprep.subr.mxu0 0.0
  %550 = vmatpush1.msra.mxu0 0.0
  %551 = vmatprep.subr.mxu0 0.0
  %552 = vmatpush1.msra.mxu0 0.0
  %553 = vmatprep.subr.mxu0 0.0
  %554 = vmatpush1.msra.mxu0 0.0
  %555 = vmatprep.subr.mxu0 0.0
  %556 = vmatpush1.msra.mxu0 0.0
  %557 = vmatprep.subr.mxu0 0.0
  %558 = vmatpush1.msra.mxu0 0.0
  %559 = vmatprep.subr.mxu0 0.0
  %560 = vmatpush1.msra.mxu0 0.0
  %561 = vmatprep.subr.mxu0 0.0
  %562 = vmatpush1.msra.mxu0 0.0
  %563 = vmatprep.subr.mxu0 0.0
  %564 = vmatpush1.msra.mxu0 0.0
  %565 = vmatprep.subr.mxu0 0.0
  %566 = vmatpush1.msra.mxu0 0.0
  %567 = vmatprep.subr.mxu0 0.0
  %568 = vmatpush1.msra.mxu0 0.0
  %569 = vmatprep.subr.mxu0 0.0
  %570 = vmatpush1.msra.mxu0 0.0
  %571 = vmatprep.subr.mxu0 0.0
  %572 = vmatpush1.msra.mxu0 0.0
  %573 = vmatprep.subr.mxu0 0.0
  %574 = vmatpush1.msra.mxu0 0.0
  %575 = vmatprep.subr.mxu0 0.0
  %576 = vmatpush1.msra.mxu0 0.0
  %577 = vmatprep.subr.mxu0 0.0
  %578 = vmatpush1.msra.mxu0 0.0
  %579 = vmatprep.subr.mxu0 0.0
  %580 = vmatpush1.msra.mxu0 0.0
  %581 = vmatprep.subr.mxu0 0.0
  %582 = vmatpush1.msra.mxu0 0.0
  %583 = vmatprep.subr.mxu0 0.0
  %584 = vmatpush1.msra.mxu0 0.0
  %585 = vmatprep.subr.mxu0 0.0
  %586 = vmatpush1.msra.mxu0 0.0
  %587 = vmatprep.subr.mxu0 0.0
  %588 = vmatpush1.msra.mxu0 0.0
  %589 = vmatprep.subr.mxu0 0.0
  %590 = vmatpush1.msra.mxu0 0.0
  %591 = vmatprep.subr.mxu0 0.0
  %592 = vmatpush1.msra.mxu0 0.0
  %593 = vmatprep.subr.mxu0 0.0
  %594 = vmatpush1.msra.mxu0 0.0
  %595 = vmatprep.mubr.f32.mxu0 0.0
  %596 = vmatmul.mubr.f32.gmra.mrb[0].mxu0 %v526
  %v597 = vpop.f32.mrb[0].mxu0
  %v598 = vadd.f32 %v522, %v597
  %v599 = vpop.f32.mrb[0].mxu0
  %600 = vmatprep.mubr.f32.mxu0 0.0
  %601 = vmatmul.mubr.f32.gmra.mrb[0].mxu0 %v529
  %v602 = vpop.f32.mrb[0].mxu0
  %v603 = vadd.f32 %v522, %v602
  %v604 = vpop.f32.mrb[0].mxu0
  %605 = vdwg.mxu0
  %v606 = vtanh.pop %v598
  %v607 = vtanh.pop %v603
  %v608 = vld [vmem:[%s6] sm:$0xff]
  %v609 = vld [vmem:[%s6 + $0x8] sm:$0xff]
  %v610 = vld [vmem:[%s6 + $0x10] sm:$0xff]
  %v611 = vld [vmem:[%s6 + $0x18] sm:$0xff]
  %v612 = vld [vmem:[%s7] sm:$0x1]
  %v614 = vlaneseq
  %v615 = vshrl.u32 %v614, 7
  %v616 = vsub.s32 0, %v615
  %v617 = vrot.slane %v612, %v616
  %v620 = vsel %vm524, %v606, 0
  %v623 = vsel %vm524, %v607, 0
  %625 = vmatprep.subr.mxu0 0.0
  %626 = vmatpush1.msra.mxu0 %v608
  %627 = vmatprep.subr.mxu0 0.0
  %628 = vmatpush1.msra.mxu0 %v609
  %629 = vmatprep.subr.mxu0 0.0
  %630 = vmatpush1.msra.mxu0 %v610
  %631 = vmatprep.subr.mxu0 0.0
  %632 = vmatpush1.msra.mxu0 %v611
  %633 = vmatprep.subr.mxu0 0.0
  %634 = vmatpush1.msra.mxu0 0.0
  %635 = vmatprep.subr.mxu0 0.0
  %636 = vmatpush1.msra.mxu0 0.0
  %637 = vmatprep.subr.mxu0 0.0
  %638 = vmatpush1.msra.mxu0 0.0
  %639 = vmatprep.subr.mxu0 0.0
  %640 = vmatpush1.msra.mxu0 0.0
  %641 = vmatprep.subr.mxu0 0.0
  %642 = vmatpush1.msra.mxu0 0.0
  %643 = vmatprep.subr.mxu0 0.0
  %644 = vmatpush1.msra.mxu0 0.0
  %645 = vmatprep.subr.mxu0 0.0
  %646 = vmatpush1.msra.mxu0 0.0
  %647 = vmatprep.subr.mxu0 0.0
  %648 = vmatpush1.msra.mxu0 0.0
  %649 = vmatprep.subr.mxu0 0.0
  %650 = vmatpush1.msra.mxu0 0.0
  %651 = vmatprep.subr.mxu0 0.0
  %652 = vmatpush1.msra.mxu0 0.0
  %653 = vmatprep.subr.mxu0 0.0
  %654 = vmatpush1.msra.mxu0 0.0
  %655 = vmatprep.subr.mxu0 0.0
  %656 = vmatpush1.msra.mxu0 0.0
  %657 = vmatprep.subr.mxu0 0.0
  %658 = vmatpush1.msra.mxu0 0.0
  %659 = vmatprep.subr.mxu0 0.0
  %660 = vmatpush1.msra.mxu0 0.0
  %661 = vmatprep.subr.mxu0 0.0
  %662 = vmatpush1.msra.mxu0 0.0
  %663 = vmatprep.subr.mxu0 0.0
  %664 = vmatpush1.msra.mxu0 0.0
  %665 = vmatprep.subr.mxu0 0.0
  %666 = vmatpush1.msra.mxu0 0.0
  %667 = vmatprep.subr.mxu0 0.0
  %668 = vmatpush1.msra.mxu0 0.0
  %669 = vmatprep.subr.mxu0 0.0
  %670 = vmatpush1.msra.mxu0 0.0
  %671 = vmatprep.subr.mxu0 0.0
  %672 = vmatpush1.msra.mxu0 0.0
  %673 = vmatprep.subr.mxu0 0.0
  %674 = vmatpush1.msra.mxu0 0.0
  %675 = vmatprep.subr.mxu0 0.0
  %676 = vmatpush1.msra.mxu0 0.0
  %677 = vmatprep.subr.mxu0 0.0
  %678 = vmatpush1.msra.mxu0 0.0
  %679 = vmatprep.subr.mxu0 0.0
  %680 = vmatpush1.msra.mxu0 0.0
  %681 = vmatprep.subr.mxu0 0.0
  %682 = vmatpush1.msra.mxu0 0.0
  %683 = vmatprep.subr.mxu0 0.0
  %684 = vmatpush1.msra.mxu0 0.0
  %685 = vmatprep.subr.mxu0 0.0
  %686 = vmatpush1.msra.mxu0 0.0
  %687 = vmatprep.subr.mxu0 0.0
  %688 = vmatpush1.msra.mxu0 0.0
  %689 = vmatprep.mubr.f32.mxu0 0.0
  %690 = vmatmul.mubr.f32.gmra.mrb[0].mxu0 %v620
  %v691 = vpop.f32.mrb[0].mxu0
  %v692 = vadd.f32 %v617, %v691
  %v693 = vpop.f32.mrb[0].mxu0
  %694 = vmatprep.mubr.f32.mxu0 0.0
  %695 = vmatmul.mubr.f32.gmra.mrb[0].mxu0 %v623
  %v696 = vpop.f32.mrb[0].mxu0
  %v697 = vadd.f32 %v617, %v696
  %v698 = vpop.f32.mrb[0].mxu0
  %699 = vdwg.mxu0
  %s700 = sld [smem:[#allocation2]]
  %v701 = vstv %s700
  %v702 = vmul.f32 %v701, %v692
  %v703 = vmul.f32 %v701, %v697
  %v704 = vld [vmem:[%s1] sm:$0xff]
  %v705 = vld [vmem:[%s1 + $0x8] sm:$0xff]
  %v706 = vadd.f32 %v702, %v704
  %v707 = vadd.f32 %v703, %v705
  %vm708 = vcmask 31744
  %709 = vst.msk [vmem:[%s9] sm:$0xff] %vm708, %v706
  %710 = vst.msk [vmem:[%s9 + $0x8] sm:$0xff] %vm708, %v707
  // Predicated region
  $region38: #{tpu_custom_call.1} parent=0 // pred_check
    _
  $region39: #{tpu_custom_call.1} parent=0 // pred_check_branch
    %712 = sbr.rel (0) target = $region41
  $region40: #{tpu_custom_call.1} parent=0 // pred_region
    _
  $region41: #{tpu_custom_call.1} parent=0 // pred_fallthru
    _
  // Predicated region
  $region42: #{tpu_custom_call.1} parent=0 // pred_check
    _
  $region43: #{tpu_custom_call.1} parent=0 // pred_check_branch
    %714 = sbr.rel (0) target = $region45
  $region44: #{tpu_custom_call.1} parent=0 // pred_region
    _
  $region45: #{tpu_custom_call.1} parent=0 // pred_fallthru
    _

</llo_original>
